<compile_context>
chip_gen: v7x
topology: tpu7x:2x2x1
jax: 0.10.0
libtpu: 0.0.40
codegen_flags: <defaults>
</compile_context>

<pallas_src>
import functools

import jax
import jax.numpy as jnp
from jax.experimental import pallas as pl
from jax.experimental.pallas import tpu as pltpu

SUBLANES = 8
LANES = 128
MAX_BLOCK_ROWS = 2048          # (2048,128) f32 = 1 MiB per pipeline buffer


def _round_up(x, m):
    return ((x + m - 1) // m) * m


def _dice_partial_kernel(x_ref, t_ref, prod_ref, sum_ref, *,
                         rows, block_rows, need_mask):
    """Accumulate per-split partial sums of x*t and (x+t) into (1,8,128) outputs."""
    s = pl.program_id(0)          # parallel split (one per TensorCore on v7x)
    i = pl.program_id(1)          # reduction step within the split

    @pl.when(i == 0)
    def _init():
        prod_ref[...] = jnp.zeros_like(prod_ref)
        sum_ref[...] = jnp.zeros_like(sum_ref)

    x = x_ref[...].astype(jnp.float32)
    t = t_ref[...].astype(jnp.float32)

    if need_mask:
        # Global (unclamped) block index.  Rows >= `rows` are either garbage from
        # a partial edge DMA or duplicated reads from a clamped phantom block:
        # zero them so they contribute nothing to either sum.
        gb = s * pl.num_programs(1) + i
        row_ids = gb * block_rows + jax.lax.broadcasted_iota(
            jnp.int32, (block_rows, LANES), 0)
        valid = row_ids < rows
        zero = jnp.float32(0.0)
        x = jnp.where(valid, x, zero)
        t = jnp.where(valid, t, zero)

    k = block_rows // SUBLANES
    xr = x.reshape(k, SUBLANES, LANES)
    tr = t.reshape(k, SUBLANES, LANES)
    # Pure VPU accumulation into lane-dense (8,128) accumulators; the cross-lane
    # reduction is deferred to the (tiny) wrapper-side combine.
    prod_ref[...] += jnp.sum(xr * tr, axis=0)[None]
    sum_ref[...] += jnp.sum(xr + tr, axis=0)[None]


def dice_loss(inputs, targets, smooth=1.0):
    """Pallas implementation of DiceLoss.forward(inputs, targets, smooth)."""
    x = jnp.reshape(inputs, (-1,))
    t = jnp.reshape(targets, (-1,))
    n = x.shape[0]
    if n == 0:
        s = jnp.float32(smooth)
        return jnp.float32(1.0) - (jnp.float32(2.0) * 0.0 + s) / (0.0 + s)

    # Pad (only if necessary) so the flat length is a multiple of 8*128, then view
    # the data as a lane-dense (rows, 128) slab.  Zero padding changes no sum.
    tile = SUBLANES * LANES
    padded_n = _round_up(n, tile)
    if padded_n != n:
        x = jnp.pad(x, (0, padded_n - n))
        t = jnp.pad(t, (0, padded_n - n))
    rows = padded_n // LANES
    x2 = x.reshape(rows, LANES)
    t2 = t.reshape(rows, LANES)

    block_rows = min(MAX_BLOCK_ROWS, rows)           # rows is a multiple of 8
    blocks_total = pl.cdiv(rows, block_rows)
    nsplit = 2 if blocks_total >= 2 else 1           # use both TCs on v7x
    bps = pl.cdiv(blocks_total, nsplit)              # blocks per split
    need_mask = nsplit * bps * block_rows != rows

    def in_index_map(s, i):
        # Clamp phantom / out-of-range blocks so the DMA never walks off the
        # array; the in-kernel row mask zeroes rows that are not really ours.
        return (jnp.minimum(s * bps + i, blocks_total - 1), 0)

    kernel = functools.partial(
        _dice_partial_kernel,
        rows=rows, block_rows=block_rows, need_mask=need_mask)

    bytes_acc = (x2.size * x2.dtype.itemsize + t2.size * t2.dtype.itemsize
                 + 2 * nsplit * SUBLANES * LANES * 4)

    prod_part, sum_part = pl.pallas_call(
        kernel,
        out_shape=(
            jax.ShapeDtypeStruct((nsplit, SUBLANES, LANES), jnp.float32),
            jax.ShapeDtypeStruct((nsplit, SUBLANES, LANES), jnp.float32),
        ),
        grid_spec=pltpu.PrefetchScalarGridSpec(
            num_scalar_prefetch=0,
            grid=(nsplit, bps),
            in_specs=[
                pl.BlockSpec((block_rows, LANES), in_index_map),
                pl.BlockSpec((block_rows, LANES), in_index_map),
            ],
            out_specs=[
                pl.BlockSpec((1, SUBLANES, LANES), lambda s, i: (s, 0, 0)),
                pl.BlockSpec((1, SUBLANES, LANES), lambda s, i: (s, 0, 0)),
            ],
        ),
        compiler_params=pltpu.CompilerParams(
            dimension_semantics=("parallel", "arbitrary"),
            vmem_limit_bytes=32 * 1024 * 1024,
        ),
        cost_estimate=pl.CostEstimate(
            flops=5 * padded_n, transcendentals=0, bytes_accessed=bytes_acc),
    )(x2, t2)

    intersection = jnp.sum(prod_part)
    totals = jnp.sum(sum_part)                        # == sum(x) + sum(t)
    smooth = jnp.float32(smooth)
    dice = (jnp.float32(2.0) * intersection + smooth) / (totals + smooth)
    return jnp.float32(1.0) - dice


def dice_loss_ref(inputs, targets, smooth=1.0):
    x = jnp.reshape(inputs, (-1,)).astype(jnp.float32)
    t = jnp.reshape(targets, (-1,)).astype(jnp.float32)
    inter = jnp.sum(x * t)
    dice = (2.0 * inter + smooth) / (jnp.sum(x) + jnp.sum(t) + smooth)
    return 1.0 - dice


if __name__ == "__main__":
    key = jax.random.PRNGKey(0)
    k1, k2, k3, k4 = jax.random.split(key, 4)

    # Small segmentation-style NCHW inputs: sigmoid probabilities vs binary mask.
    x = jax.nn.sigmoid(jax.random.normal(k1, (2, 4, 16, 16), dtype=jnp.float32))
    y = (jax.random.uniform(k2, (2, 4, 16, 16)) > 0.5).astype(jnp.float32)

    loss = dice_loss(x, y, smooth=1.0)
    jax.block_until_ready(loss)
    ref = dice_loss_ref(x, y, smooth=1.0)
    assert jnp.allclose(loss, ref, rtol=1e-5, atol=1e-6), (loss, ref)

    # Larger ragged case exercising multi-block grid, the 2-way core split,
    # tail padding and the in-kernel row mask / clamped index_map.
    n = 640037
    xb = jax.random.uniform(k3, (n,), dtype=jnp.float32)
    yb = (jax.random.uniform(k4, (n,)) > 0.5).astype(jnp.float32)
    loss_b = dice_loss(xb, yb, smooth=1.0)
    jax.block_until_ready(loss_b)
    ref_b = dice_loss_ref(xb, yb, smooth=1.0)
    assert jnp.allclose(loss_b, ref_b, rtol=1e-4, atol=1e-5), (loss_b, ref_b)

    print("KERNEL_OK")
</pallas_src>

<mosaic_0001>
module attributes {stable_mosaic.version = 11 : i64} {
  func.func @_dice_partial_kernel(%arg0: i32, %arg1: i32, %arg2: memref<16x128xf32, #tpu.memory_space<vmem>>, %arg3: memref<16x128xf32, #tpu.memory_space<vmem>>, %arg4: memref<1x8x128xf32, #tpu.memory_space<vmem>>, %arg5: memref<1x8x128xf32, #tpu.memory_space<vmem>>) attributes {dimension_semantics = [#tpu.dimension_semantics<parallel>, #tpu.dimension_semantics<arbitrary>], iteration_bounds = array<i64: 1, 1>, scalar_prefetch = 0 : i64, scratch_operands = 0 : i64, tpu.core_type = #tpu.core_type<tc>, window_params = [{transform_indices = @transform_0, window_bounds = array<i64: 16, 128>}, {transform_indices = @transform_1, window_bounds = array<i64: 16, 128>}, {transform_indices = @transform_2, window_bounds = array<i64: 1, 8, 128>}, {transform_indices = @transform_3, window_bounds = array<i64: 1, 8, 128>}]} {
    %c0_i32 = arith.constant 0 : i32
    %0 = arith.cmpi eq, %arg1, %c0_i32 : i32
    %1 = arith.extui %0 : i1 to i32
    %c0_i32_0 = arith.constant 0 : i32
    %2 = arith.cmpi ne, %1, %c0_i32_0 : i32
    scf.if %2 {
      %cst_17 = arith.constant 0.000000e+00 : f32
      %19 = vector.broadcast %cst_17 : f32 to vector<1x8x128xf32>
      %c0_18 = arith.constant 0 : index
      %c0_19 = arith.constant 0 : index
      %c0_20 = arith.constant 0 : index
      %20 = vector.load %arg4[%c0_18, %c0_19, %c0_20] : memref<1x8x128xf32, #tpu.memory_space<vmem>>, vector<1x8x128xf32>
      tpu.vector_store %arg4[%c0_18, %c0_19, %c0_20], %19 {strides = array<i32>} : memref<1x8x128xf32, #tpu.memory_space<vmem>>, vector<1x8x128xf32>,
      %cst_21 = arith.constant 0.000000e+00 : f32
      %21 = vector.broadcast %cst_21 : f32 to vector<1x8x128xf32>
      %c0_22 = arith.constant 0 : index
      %c0_23 = arith.constant 0 : index
      %c0_24 = arith.constant 0 : index
      %22 = vector.load %arg5[%c0_22, %c0_23, %c0_24] : memref<1x8x128xf32, #tpu.memory_space<vmem>>, vector<1x8x128xf32>
      tpu.vector_store %arg5[%c0_22, %c0_23, %c0_24], %21 {strides = array<i32>} : memref<1x8x128xf32, #tpu.memory_space<vmem>>, vector<1x8x128xf32>,
    } else {
    }
    %c0 = arith.constant 0 : index
    %c0_1 = arith.constant 0 : index
    %3 = vector.load %arg2[%c0, %c0_1] : memref<16x128xf32, #tpu.memory_space<vmem>>, vector<16x128xf32>
    %c0_2 = arith.constant 0 : index
    %c0_3 = arith.constant 0 : index
    %4 = vector.load %arg3[%c0_2, %c0_3] : memref<16x128xf32, #tpu.memory_space<vmem>>, vector<16x128xf32>
    %5 = vector.shape_cast %3 : vector<16x128xf32> to vector<2x8x128xf32>
    %6 = vector.shape_cast %4 : vector<16x128xf32> to vector<2x8x128xf32>
    %c0_4 = arith.constant 0 : index
    %c0_5 = arith.constant 0 : index
    %c0_6 = arith.constant 0 : index
    %7 = vector.load %arg4[%c0_4, %c0_5, %c0_6] : memref<1x8x128xf32, #tpu.memory_space<vmem>>, vector<1x8x128xf32>
    %8 = arith.mulf %5, %6 : vector<2x8x128xf32>
    %cst = arith.constant dense<0.000000e+00> : vector<8x128xf32>
    %9 = vector.multi_reduction <add>, %8, %cst [0] : vector<2x8x128xf32> to vector<8x128xf32>
    %10 = vector.shape_cast %9 : vector<8x128xf32> to vector<1x8x128xf32>
    %11 = arith.addf %7, %10 : vector<1x8x128xf32>
    %c0_7 = arith.constant 0 : index
    %c0_8 = arith.constant 0 : index
    %c0_9 = arith.constant 0 : index
    %12 = vector.load %arg4[%c0_7, %c0_8, %c0_9] : memref<1x8x128xf32, #tpu.memory_space<vmem>>, vector<1x8x128xf32>
    tpu.vector_store %arg4[%c0_7, %c0_8, %c0_9], %11 {strides = array<i32>} : memref<1x8x128xf32, #tpu.memory_space<vmem>>, vector<1x8x128xf32>,
    %c0_10 = arith.constant 0 : index
    %c0_11 = arith.constant 0 : index
    %c0_12 = arith.constant 0 : index
    %13 = vector.load %arg5[%c0_10, %c0_11, %c0_12] : memref<1x8x128xf32, #tpu.memory_space<vmem>>, vector<1x8x128xf32>
    %14 = arith.addf %5, %6 : vector<2x8x128xf32>
    %cst_13 = arith.constant dense<0.000000e+00> : vector<8x128xf32>
    %15 = vector.multi_reduction <add>, %14, %cst_13 [0] : vector<2x8x128xf32> to vector<8x128xf32>
    %16 = vector.shape_cast %15 : vector<8x128xf32> to vector<1x8x128xf32>
    %17 = arith.addf %13, %16 : vector<1x8x128xf32>
    %c0_14 = arith.constant 0 : index
    %c0_15 = arith.constant 0 : index
    %c0_16 = arith.constant 0 : index
    %18 = vector.load %arg5[%c0_14, %c0_15, %c0_16] : memref<1x8x128xf32, #tpu.memory_space<vmem>>, vector<1x8x128xf32>
    tpu.vector_store %arg5[%c0_14, %c0_15, %c0_16], %17 {strides = array<i32>} : memref<1x8x128xf32, #tpu.memory_space<vmem>>, vector<1x8x128xf32>,
    return
  }
  func.func @transform_0(%arg0: i32, %arg1: i32) -> (i32, i32) {
    %c1_i32 = arith.constant 1 : i32
    %0 = arith.muli %arg0, %c1_i32 : i32
    %1 = arith.addi %0, %arg1 : i32
    %c0_i32 = arith.constant 0 : i32
    %2 = arith.minsi %1, %c0_i32 : i32
    %c0_i32_0 = arith.constant 0 : i32
    %c0_i32_1 = arith.constant 0 : i32
    return %2, %c0_i32_0 : i32, i32
  }
  func.func @transform_1(%arg0: i32, %arg1: i32) -> (i32, i32) {
    %c1_i32 = arith.constant 1 : i32
    %0 = arith.muli %arg0, %c1_i32 : i32
    %1 = arith.addi %0, %arg1 : i32
    %c0_i32 = arith.constant 0 : i32
    %2 = arith.minsi %1, %c0_i32 : i32
    %c0_i32_0 = arith.constant 0 : i32
    %c0_i32_1 = arith.constant 0 : i32
    return %2, %c0_i32_0 : i32, i32
  }
  func.func @transform_2(%arg0: i32, %arg1: i32) -> (i32, i32, i32) {
    %c0_i32 = arith.constant 0 : i32
    %c0_i32_0 = arith.constant 0 : i32
    %c0_i32_1 = arith.constant 0 : i32
    return %arg0, %c0_i32, %c0_i32_0 : i32, i32, i32
  }
  func.func @transform_3(%arg0: i32, %arg1: i32) -> (i32, i32, i32) {
    %c0_i32 = arith.constant 0 : i32
    %c0_i32_0 = arith.constant 0 : i32
    %c0_i32_1 = arith.constant 0 : i32
    return %arg0, %c0_i32, %c0_i32_0 : i32, i32, i32
  }
}

</mosaic_0001>

<llo_original>
// kernel: tpu_custom_call.1
$region0: #{tpu_custom_call.1}
  #allocation0 [shape = 'u32[]', space=smem, size = 0x4, offset = 0x4, fixed_abs, tag = 'smem constant byte address 0x4 - core index']
  #allocation1 [shape = 'u32[144,128]{1,0:T(1,128)}', space=vmem, size = 0x12000, scoped, tag = 'internal scratch']
  %s0 = inlined_call_operand.hbm [shape: f32[16,128], index: 0, kind: input, shape index: {}]
  %s1 = inlined_call_operand.hbm [shape: f32[16,128], index: 1, kind: input, shape index: {}]
  %s2 = inlined_call_operand.hbm [shape: f32[1,8,128], index: 2, kind: output, shape index: {0}]
  %s3 = inlined_call_operand.hbm [shape: f32[1,8,128], index: 3, kind: output, shape index: {1}]
  %4 = xla_tuple %s2, %s3
  %s5 = sld [smem:[#allocation0]]
  $region38: #{tpu_custom_call.1} parent=0
    _
  %s7 = ssub.s32 1, %s5
  %s8 = scalar_select 0, %s7, %s5
  $region1: #{tpu_custom_call.1} parent=0
    #allocation2 [shape = 'u8[8192]{0}', space=vmem, size = 0x2000, scoped, tag = 'input window, operand 0, single buffered']
    #allocation3 [shape = 's32[1]{0}', space=sflag, size = 0x4, scoped, tag = 'scoped memory for tpu_custom_call.1']
    #allocation4 [shape = 's32[1]{0}', space=sflag, size = 0x4, scoped, tag = 'scoped memory for tpu_custom_call.1']
    #allocation5 [shape = 'u8[8192]{0}', space=vmem, size = 0x2000, scoped, tag = 'input window, operand 1, single buffered']
    #allocation6 [shape = 's32[1]{0}', space=sflag, size = 0x4, scoped, tag = 'scoped memory for tpu_custom_call.1']
    #allocation7 [shape = 'u8[4096]{0}', space=vmem, size = 0x1000, scoped, tag = 'output window, operand 0, single buffered']
    #allocation8 [shape = 'u8[4096]{0}', space=vmem, size = 0x1000, scoped, tag = 'output window, operand 1, single buffered']
    #allocation9 [shape = 's32[1]{0}', space=sflag, size = 0x4, scoped, tag = 'scoped memory for tpu_custom_call.1']
    %9 = vsyncpa [#allocation3], 0
    %10 = vsyncpa [#allocation6], 0
    %11 = vsyncpa [#allocation4], 0
    %12 = vsyncpa [#allocation9], 0
    // Predicated region
    $region2: #{tpu_custom_call.1} parent=1 // pred_check
      _
    $region3: #{tpu_custom_call.1} parent=1 // pred_check_branch
      %14 = sbr.rel (0) target = $region5
    $region4: #{tpu_custom_call.1} parent=1 // pred_region
      %s15 = sadd.s32 0, 0
      %p16 = scmp.lt.s32.totalorder %s15, 0
      %s17 = scalar_select %p16, %s15, 0
      %s18 = smul.u32 2, %s17
      %s20 = ssub.s32 256, 256
      %21 = vsyncadd [#allocation3], %s20
      %s22 = smul.addr %s18, 128
      %s23 = scalar_lea.hbm %s0, %s22
      %s24 = sshll.u32 [#allocation2], 4
      %s25 = int_to_ptr.vmem [resolvable:$true] %s24
      %30 = dma.hbm_to_vmem [thread:$0]  %s23, 256, %s25, [#allocation3], 128, 128, 8
    $region5: #{tpu_custom_call.1} parent=1 // pred_fallthru
      _
    // Predicated region
    $region6: #{tpu_custom_call.1} parent=1 // pred_check
      _
    $region7: #{tpu_custom_call.1} parent=1 // pred_check_branch
      %32 = sbr.rel (0) target = $region9
    $region8: #{tpu_custom_call.1} parent=1 // pred_region
      %s33 = sadd.s32 0, 0
      %p34 = scmp.lt.s32.totalorder %s33, 0
      %s35 = scalar_select %p34, %s33, 0
      %s36 = smul.u32 2, %s35
      %s38 = ssub.s32 256, 256
      %39 = vsyncadd [#allocation6], %s38
      %s40 = smul.addr %s36, 128
      %s41 = scalar_lea.hbm %s1, %s40
      %s42 = sshll.u32 [#allocation5], 4
      %s43 = int_to_ptr.vmem [resolvable:$true] %s42
      %48 = dma.hbm_to_vmem [thread:$0]  %s41, 256, %s43, [#allocation6], 128, 128, 8
    $region9: #{tpu_custom_call.1} parent=1 // pred_fallthru
      _
    // Predicated region
    $region10: #{tpu_custom_call.1} parent=1 // pred_check
      _
    $region11: #{tpu_custom_call.1} parent=1 // pred_check_branch
      %50 = sbr.rel (0) target = $region13
    $region12: #{tpu_custom_call.1} parent=1 // pred_region
      %51 = dma.done [#allocation3], 256
    $region13: #{tpu_custom_call.1} parent=1 // pred_fallthru
      _
    // Predicated region
    $region14: #{tpu_custom_call.1} parent=1 // pred_check
      _
    $region15: #{tpu_custom_call.1} parent=1 // pred_check_branch
      %53 = sbr.rel (0) target = $region17
    $region16: #{tpu_custom_call.1} parent=1 // pred_region
      %54 = dma.done [#allocation6], 256
    $region17: #{tpu_custom_call.1} parent=1 // pred_fallthru
      _
    %s55 = sadd.s32 0, 0
    %p56 = scmp.lt.s32.totalorder %s55, 0
    %s57 = scalar_select %p56, %s55, 0
    %s58 = smul.u32 2, %s57
    %s59 = sadd.s32 0, 0
    %p60 = scmp.lt.s32.totalorder %s59, 0
    %s61 = scalar_select %p60, %s59, 0
    %s62 = smul.u32 2, %s61
    %p63 = scmp.eq.s32.totalorder 0, 0
    // Predicated region
    $region18: #{tpu_custom_call.1} parent=1 // pred_check
      %p64 = pneg %p63
    $region19: #{tpu_custom_call.1} parent=1 // pred_check_branch
      %66 = sbr.rel (%p64) target = $region21
    $region20: #{tpu_custom_call.1} parent=1 // pred_region
      %67 = vst [vmem:[#allocation7] sm:$0xff] 0.0
      %68 = vst [vmem:[#allocation8] sm:$0xff] 0.0
    $region21: #{tpu_custom_call.1} parent=1 // pred_fallthru
      _
    %v69 = vld [vmem:[#allocation2] sm:$0xff]
    %v70 = vld [vmem:[#allocation2 + $0x8] sm:$0xff]
    %v71 = vld [vmem:[#allocation5] sm:$0xff]
    %v72 = vld [vmem:[#allocation5 + $0x8] sm:$0xff]
    %v73 = vld [vmem:[#allocation7] sm:$0xff]
    %v74 = vmul.f32 %v69, %v71
    %v75 = vmul.f32 %v70, %v72
    %v76 = vadd.f32 %v74, %v75
    %v77 = vadd.f32 %v73, %v76
    %78 = vst [vmem:[#allocation7] sm:$0xff] %v77
    %v79 = vld [vmem:[#allocation8] sm:$0xff]
    %v80 = vadd.f32 %v69, %v71
    %v81 = vadd.f32 %v70, %v72
    %v82 = vadd.f32 %v80, %v81
    %v83 = vadd.f32 %v79, %v82
    %84 = vst [vmem:[#allocation8] sm:$0xff] %v83
    // Predicated region
    $region22: #{tpu_custom_call.1} parent=1 // pred_check
      _
    $region23: #{tpu_custom_call.1} parent=1 // pred_check_branch
      %86 = sbr.rel (0) target = $region25
    $region24: #{tpu_custom_call.1} parent=1 // pred_region
      %s88 = ssub.s32 128, 128
      %89 = vsyncadd [#allocation4], %s88
      %s91 = sshll.u32 [#allocation7], 4
      %s92 = int_to_ptr.vmem [resolvable:$true] %s91
      %94 = dma.vmem_to_hbm [thread:$0]  %s92, 128, %s2, [#allocation4]
    $region25: #{tpu_custom_call.1} parent=1 // pred_fallthru
      _
    // Predicated region
    $region26: #{tpu_custom_call.1} parent=1 // pred_check
      _
    $region27: #{tpu_custom_call.1} parent=1 // pred_check_branch
      %96 = sbr.rel (0) target = $region29
    $region28: #{tpu_custom_call.1} parent=1 // pred_region
      %s98 = ssub.s32 128, 128
      %99 = vsyncadd [#allocation9], %s98
      %s101 = sshll.u32 [#allocation8], 4
      %s102 = int_to_ptr.vmem [resolvable:$true] %s101
      %104 = dma.vmem_to_hbm [thread:$0]  %s102, 128, %s3, [#allocation9]
    $region29: #{tpu_custom_call.1} parent=1 // pred_fallthru
      _
    // Predicated region
    $region30: #{tpu_custom_call.1} parent=1 // pred_check
      _
    $region31: #{tpu_custom_call.1} parent=1 // pred_check_branch
      %106 = sbr.rel (0) target = $region33
    $region32: #{tpu_custom_call.1} parent=1 // pred_region
      %107 = dma.done [#allocation4], 128
    $region33: #{tpu_custom_call.1} parent=1 // pred_fallthru
      _
    // Predicated region
    $region34: #{tpu_custom_call.1} parent=1 // pred_check
      _
    $region35: #{tpu_custom_call.1} parent=1 // pred_check_branch
      %109 = sbr.rel (0) target = $region37
    $region36: #{tpu_custom_call.1} parent=1 // pred_region
      %110 = dma.done [#allocation9], 128
    $region37: #{tpu_custom_call.1} parent=1 // pred_fallthru
      _
    %111 = vsyncpa [#allocation3], 1
    %112 = vsyncpa [#allocation6], 1
    %113 = vsyncpa [#allocation4], 1
    %114 = vsyncpa [#allocation9], 1

</llo_original>
